<compile_context>
chip_gen: v7x
topology: tpu7x:2x2x1
jax: 0.10.0
libtpu: 0.0.40
codegen_flags: <defaults>
</compile_context>

<pallas_src>
import functools

import jax
import jax.numpy as jnp
from jax import lax
from jax.experimental import pallas as pl
from jax.experimental.pallas import tpu as pltpu

_LANES = 128
_SUBLANES = 8
_SUB_ROWS = 256            # rows per in-kernel fold sub-chunk (bounds live ranges)
_DEF_TILE_ROWS = 2048      # (2048, 128) f32 = 1 MiB per input per pipeline buffer
_VMEM_BUDGET = 16 * 1024 * 1024  # conservative double-buffered input budget


def _round_up(x, m):
    return ((x + m - 1) // m) * m


def _detect_num_tensorcores():
    """TensorCores addressable by one pallas_call (v7x / megacore: 2)."""
    try:
        dev = jax.devices()[0]
        if dev.platform != "tpu":
            return 1
        return max(1, int(getattr(dev, "num_cores", 1) or 1))
    except Exception:
        return 1


def _loss_elems(p, t, loss_type, target_const):
    """Elementwise loss in f32 (used for the <128-elem tail and tiny-input path)."""
    p = p.astype(jnp.float32)
    if target_const is not None:
        t = jnp.float32(target_const)
    else:
        t = t.astype(jnp.float32)
    if loss_type == "bce":
        log_p = jnp.maximum(jnp.log(p), -100.0)
        log_1mp = jnp.maximum(jnp.log(1.0 - p), -100.0)
        return -(log_1mp + t * (log_p - log_1mp))
    d = p - t
    return d * d


def _gan_loss_kernel(*refs, loss_type, target_const, rows_valid, tile_rows,
                     sub_rows, blocks_per_core, needs_mask):
    """One grid step: fold a (tile_rows, 128) block into this core's (8, 128) acc."""
    if target_const is None:
        p_ref, t_ref, o_ref = refs
    else:
        p_ref, o_ref = refs
        t_ref = None

    c = pl.program_id(0)            # TensorCore split ("parallel")
    i = pl.program_id(1)            # reduce axis ("arbitrary")
    gi = c * blocks_per_core + i    # global block index along the row axis

    @pl.when(i == 0)
    def _init():
        o_ref[...] = jnp.zeros_like(o_ref)

    def tile_loss(p, t):
        if loss_type == "bce":
            if target_const is None:
                log_p = jnp.maximum(jnp.log(p), -100.0)
                log_1mp = jnp.maximum(jnp.log(1.0 - p), -100.0)
                return -(log_1mp + t * (log_p - log_1mp))
            if target_const == 1.0:   # real targets: one transcendental / elem
                return -jnp.maximum(jnp.log(p), -100.0)
            if target_const == 0.0:   # fake targets: one transcendental / elem
                return -jnp.maximum(jnp.log(1.0 - p), -100.0)
            tc = jnp.float32(target_const)
            log_p = jnp.maximum(jnp.log(p), -100.0)
            log_1mp = jnp.maximum(jnp.log(1.0 - p), -100.0)
            return -(log_1mp + tc * (log_p - log_1mp))
        # MSE
        d = p - (jnp.float32(target_const) if target_const is not None else t)
        return d * d

    n_sub = tile_rows // sub_rows
    valid_in_block = rows_valid - gi * tile_rows  # rows of this block inside the array

    def fold(masked):
        # Stream the block through (sub_rows, 128) sub-chunks so the f32
        # intermediates stay a few vregs deep, accumulating into one (8, 128)
        # vreg-shaped partial (plain VPU adds; no cross-lane reduce per step).
        def body(s, acc):
            off = pl.multiple_of(s * sub_rows, sub_rows)
            p = p_ref[pl.ds(off, sub_rows), :].astype(jnp.float32)
            t = None
            if t_ref is not None:
                t = t_ref[pl.ds(off, sub_rows), :].astype(jnp.float32)
            loss = tile_loss(p, t)
            if masked:
                row = lax.broadcasted_iota(jnp.int32, (sub_rows, _LANES), 0)
                loss = jnp.where(row < valid_in_block - off, loss, 0.0)
            return acc + loss.reshape(sub_rows // _SUBLANES, _SUBLANES, _LANES).sum(axis=0)

        return lax.fori_loop(0, n_sub, body,
                             jnp.zeros((_SUBLANES, _LANES), jnp.float32),
                             unroll=True)

    if needs_mask:
        # Mask only on blocks that are not fully inside the array; the
        # steady-state loop is identical to the unmasked path.
        block_is_full = valid_in_block >= tile_rows

        @pl.when(block_is_full)
        def _full():
            o_ref[...] += fold(False)

        @pl.when(jnp.logical_not(block_is_full))
        def _partial():
            o_ref[...] += fold(True)
    else:
        o_ref[...] += fold(False)


@functools.partial(
    jax.jit,
    static_argnames=("loss_type", "target_value", "tile_rows",
                     "num_core_splits", "min_pallas_elements"),
)
def gan_loss(prediction, target=None, *, loss_type="bce", target_value=None,
             tile_rows=_DEF_TILE_ROWS, num_core_splits=None,
             min_pallas_elements=262144):
    """Sum-reduced GAN loss (BCE or MSE).

    Exactly one of `target` (tensor, matches the PyTorch forward) or
    `target_value` (compile-time scalar, fast path for all-ones / all-zeros GAN
    targets) must be provided.
    """
    if loss_type not in ("bce", "mse"):
        raise ValueError(f"Unsupported loss type: {loss_type}")
    if (target is None) == (target_value is None):
        raise ValueError("Provide exactly one of `target` or `target_value`.")

    target_const = None if target_value is None else float(target_value)

    p_flat = prediction.reshape(-1)
    n = p_flat.shape[0]
    t_flat = None
    if target is not None:
        t_flat = target.reshape(-1)
        if t_flat.shape[0] != n:
            raise ValueError("prediction and target must have the same size")

    rows_head = n // _LANES
    aligned = rows_head * _LANES

    # Tiny inputs: fixed pallas_call + DMA setup cost dominates -> plain XLA.
    if n < max(min_pallas_elements, _SUBLANES * _LANES) or rows_head < _SUBLANES:
        return jnp.sum(_loss_elems(p_flat, t_flat, loss_type, target_const))

    # 128-aligned head is streamed by the kernel; the (<128)-element tail is
    # folded in the wrapper -> no full-array jnp.pad copy for ragged sizes.
    p_head = p_flat if aligned == n else p_flat[:aligned]
    operands = [p_head.reshape(rows_head, _LANES)]
    if t_flat is not None:
        t_head = t_flat if aligned == n else t_flat[:aligned]
        operands.append(t_head.reshape(rows_head, _LANES))

    # Big lane-dense blocks (multiple of 8 sublanes), clamped for small inputs
    # and to a conservative double-buffered VMEM budget.
    eff_tile_rows = min(tile_rows, _round_up(rows_head, _SUBLANES))
    eff_tile_rows = max(_SUBLANES, _round_up(eff_tile_rows, _SUBLANES))
    vmem_cap_rows = _VMEM_BUDGET // (_LANES * 4 * 2 * len(operands))
    eff_tile_rows = min(eff_tile_rows,
                        max(_SUBLANES, (vmem_cap_rows // _SUBLANES) * _SUBLANES))
    sub_rows = _SUB_ROWS if eff_tile_rows % _SUB_ROWS == 0 else eff_tile_rows

    num_blocks = pl.cdiv(rows_head, eff_tile_rows)

    # Shard the reduce axis across TensorCores (v7x / megacore): leading
    # "parallel" grid axis; each core owns its own (8, 128) accumulator block.
    cores = num_core_splits if num_core_splits is not None else _detect_num_tensorcores()
    cores = max(1, min(int(cores), num_blocks))
    blocks_per_core = pl.cdiv(num_blocks, cores)
    covered_rows = cores * blocks_per_core * eff_tile_rows
    needs_mask = covered_rows > rows_head

    kernel = functools.partial(
        _gan_loss_kernel,
        loss_type=loss_type,
        target_const=target_const,
        rows_valid=rows_head,
        tile_rows=eff_tile_rows,
        sub_rows=sub_rows,
        blocks_per_core=blocks_per_core,
        needs_mask=needs_mask,
    )

    def in_index_map(c, i):
        # Clamp so padded (fully out-of-range) blocks just re-read the last
        # valid block (always an in-bounds DMA); the in-kernel mask zeroes them.
        return (jnp.minimum(c * blocks_per_core + i, num_blocks - 1), 0)

    in_specs = [pl.BlockSpec((eff_tile_rows, _LANES), in_index_map)] * len(operands)
    out_specs = pl.BlockSpec((None, _SUBLANES, _LANES), lambda c, i: (c, 0, 0))

    if loss_type == "bce":
        transcendentals = aligned if target_const in (0.0, 1.0) else 2 * aligned
    else:
        transcendentals = 0
    bytes_accessed = sum(int(op.dtype.itemsize) * int(op.size) for op in operands)
    bytes_accessed += cores * _SUBLANES * _LANES * 4
    cost = pl.CostEstimate(flops=5 * aligned, transcendentals=transcendentals,
                           bytes_accessed=bytes_accessed)

    partials = pl.pallas_call(
        kernel,
        out_shape=jax.ShapeDtypeStruct((cores, _SUBLANES, _LANES), jnp.float32),
        grid_spec=pltpu.PrefetchScalarGridSpec(
            num_scalar_prefetch=0,
            grid=(cores, blocks_per_core),
            in_specs=in_specs,
            out_specs=out_specs,
        ),
        compiler_params=pltpu.CompilerParams(
            dimension_semantics=("parallel", "arbitrary"),
        ),
        cost_estimate=cost,
    )(*operands)

    total = jnp.sum(partials)

    if aligned != n:
        tail_p = p_flat[aligned:]
        tail_t = None if t_flat is None else t_flat[aligned:]
        total = total + jnp.sum(_loss_elems(tail_p, tail_t, loss_type, target_const))
    return total


class GANLoss:
    """JAX/Pallas port of the PyTorch GANLoss module (sum reduction)."""

    def __init__(self, loss_type="bce"):
        if loss_type not in ("bce", "mse"):
            raise ValueError(f"Unsupported loss type: {loss_type}")
        self.loss_type = loss_type

    def get_target_tensor(self, prediction, target_is_real):
        if target_is_real:
            return jnp.ones_like(prediction)
        return jnp.zeros_like(prediction)

    def __call__(self, prediction, target):
        # Matches the PyTorch module's forward(prediction, target).
        return gan_loss(prediction, target, loss_type=self.loss_type)

    def forward_with_label(self, prediction, target_is_real):
        # Fast path: constant 0/1 target is never materialized nor streamed.
        return gan_loss(
            prediction,
            target_value=1.0 if target_is_real else 0.0,
            loss_type=self.loss_type,
        )


if __name__ == "__main__":
    key = jax.random.PRNGKey(0)
    k0, k1, k2 = jax.random.split(key, 3)

    # Small discriminator-output-like tensor (NCHW), values in (0, 1) for BCE.
    x_shape = (2, 4, 16, 16)
    prediction = jax.nn.sigmoid(jax.random.normal(k0, x_shape, jnp.float32))

    gan_bce = GANLoss("bce")
    gan_mse = GANLoss("mse")

    target_real = gan_bce.get_target_tensor(prediction, True)
    target_fake = gan_bce.get_target_tensor(prediction, False)

    # --- Pallas kernel path forced on the module's small shape ---
    bce_real = gan_loss(prediction, target_real, loss_type="bce", min_pallas_elements=0)
    bce_fake = gan_loss(prediction, target_fake, loss_type="bce", min_pallas_elements=0)
    mse_real = gan_loss(prediction, target_real, loss_type="mse", min_pallas_elements=0)
    bce_real_fast = gan_loss(prediction, target_value=1.0, loss_type="bce", min_pallas_elements=0)
    bce_fake_fast = gan_loss(prediction, target_value=0.0, loss_type="bce", min_pallas_elements=0)
    mse_fake_fast = gan_loss(prediction, target_value=0.0, loss_type="mse", min_pallas_elements=0)

    # --- Module-style calls (auto dispatch: tiny input -> fused XLA fallback) ---
    bce_real_mod = gan_bce(prediction, target_real)
    mse_real_mod = gan_mse(prediction, target_real)

    # --- Larger input: default dispatch exercises the multi-block Pallas path ---
    big = jax.nn.sigmoid(jax.random.normal(k1, (4, 8, 128, 128), jnp.float32))
    bce_big = gan_loss(big, target_value=1.0, loss_type="bce")
    mse_big = gan_loss(big, jnp.zeros_like(big), loss_type="mse")

    # --- Ragged size: aligned head through kernel (last-block mask), tail in wrapper ---
    y = jax.nn.sigmoid(jax.random.normal(k2, (3, 5, 7, 11), jnp.float32))
    bce_ragged = gan_loss(y, target_value=1.0, loss_type="bce", min_pallas_elements=0)
    mse_ragged = gan_loss(y, jnp.zeros_like(y), loss_type="mse", min_pallas_elements=0)

    results = (bce_real, bce_fake, mse_real, bce_real_fast, bce_fake_fast,
               mse_fake_fast, bce_real_mod, mse_real_mod, bce_big, mse_big,
               bce_ragged, mse_ragged)
    jax.block_until_ready(results)

    # Plain-JAX references (same clamp semantics as PyTorch BCELoss).
    p = prediction.astype(jnp.float32)
    ref_bce_real = jnp.sum(-jnp.maximum(jnp.log(p), -100.0))
    ref_bce_fake = jnp.sum(-jnp.maximum(jnp.log(1.0 - p), -100.0))
    ref_mse_real = jnp.sum((p - 1.0) ** 2)
    ref_mse_fake = jnp.sum(p ** 2)
    b = big.astype(jnp.float32)
    ref_bce_big = jnp.sum(-jnp.maximum(jnp.log(b), -100.0))
    ref_mse_big = jnp.sum(b ** 2)
    ref_bce_ragged = jnp.sum(-jnp.maximum(jnp.log(y), -100.0))
    ref_mse_ragged = jnp.sum(y ** 2)

    ok = lambda a, r: bool(jnp.allclose(a, r, rtol=1e-4, atol=1e-2))
    assert ok(bce_real, ref_bce_real)
    assert ok(bce_fake, ref_bce_fake)
    assert ok(mse_real, ref_mse_real)
    assert ok(bce_real_fast, ref_bce_real)
    assert ok(bce_fake_fast, ref_bce_fake)
    assert ok(mse_fake_fast, ref_mse_fake)
    assert ok(bce_real_mod, ref_bce_real)
    assert ok(mse_real_mod, ref_mse_real)
    assert ok(bce_big, ref_bce_big)
    assert ok(mse_big, ref_mse_big)
    assert ok(bce_ragged, ref_bce_ragged)
    assert ok(mse_ragged, ref_mse_ragged)

    print("KERNEL_OK")
</pallas_src>

<mosaic_0001>
module attributes {stable_mosaic.version = 11 : i64} {
  func.func @_gan_loss_kernel(%arg0: i32, %arg1: i32, %arg2: memref<16x128xf32, #tpu.memory_space<vmem>>, %arg3: memref<16x128xf32, #tpu.memory_space<vmem>>, %arg4: memref<1x8x128xf32, #tpu.memory_space<vmem>>) attributes {dimension_semantics = [#tpu.dimension_semantics<parallel>, #tpu.dimension_semantics<arbitrary>], iteration_bounds = array<i64: 1, 1>, scalar_prefetch = 0 : i64, scratch_operands = 0 : i64, tpu.core_type = #tpu.core_type<tc>, window_params = [{transform_indices = @transform_0, window_bounds = array<i64: 16, 128>}, {transform_indices = @transform_1, window_bounds = array<i64: 16, 128>}, {transform_indices = @transform_2, window_bounds = array<i64: 1, 8, 128>}]} {
    %c0_i32 = arith.constant 0 : i32
    %0 = arith.cmpi eq, %arg1, %c0_i32 : i32
    %1 = arith.extui %0 : i1 to i32
    %c0_i32_0 = arith.constant 0 : i32
    %2 = arith.cmpi ne, %1, %c0_i32_0 : i32
    scf.if %2 {
      %cst_14 = arith.constant 0.000000e+00 : f32
      %32 = vector.broadcast %cst_14 : f32 to vector<8x128xf32>
      %c0_15 = arith.constant 0 : index
      %c0_16 = arith.constant 0 : index
      %c0_17 = arith.constant 0 : index
      %33 = vector.load %arg4[%c0_15, %c0_16, %c0_17] : memref<1x8x128xf32, #tpu.memory_space<vmem>>, vector<1x8x128xf32>
      %34 = vector.shape_cast %33 : vector<1x8x128xf32> to vector<8x128xf32>
      %35 = vector.shape_cast %32 : vector<8x128xf32> to vector<1x8x128xf32>
      tpu.vector_store %arg4[%c0_15, %c0_16, %c0_17], %35 {strides = array<i32>} : memref<1x8x128xf32, #tpu.memory_space<vmem>>, vector<1x8x128xf32>,
    } else {
    }
    %c0 = arith.constant 0 : index
    %c0_1 = arith.constant 0 : index
    %c0_2 = arith.constant 0 : index
    %3 = vector.load %arg4[%c0, %c0_1, %c0_2] : memref<1x8x128xf32, #tpu.memory_space<vmem>>, vector<1x8x128xf32>
    %4 = vector.shape_cast %3 : vector<1x8x128xf32> to vector<8x128xf32>
    %cst = arith.constant 0.000000e+00 : f32
    %5 = vector.broadcast %cst : f32 to vector<8x128xf32>
    %c0_i32_3 = arith.constant 0 : i32
    %c16_i32 = arith.constant 16 : i32
    %6 = arith.muli %c0_i32_3, %c16_i32 : i32
    %7 = tpu.assume_multiple %6, 16 : i32
    %8 = arith.index_cast %7 : i32 to index
    %c0_4 = arith.constant 0 : index
    %9 = vector.load %arg2[%8, %c0_4] : memref<16x128xf32, #tpu.memory_space<vmem>>, vector<16x128xf32>
    %10 = arith.index_cast %7 : i32 to index
    %c0_5 = arith.constant 0 : index
    %11 = vector.load %arg3[%10, %c0_5] : memref<16x128xf32, #tpu.memory_space<vmem>>, vector<16x128xf32>
    %12 = math.log %9 : vector<16x128xf32>
    %cst_6 = arith.constant -1.000000e+02 : f32
    %13 = vector.broadcast %cst_6 : f32 to vector<16x128xf32>
    %14 = arith.maximumf %12, %13 : vector<16x128xf32>
    %cst_7 = arith.constant 1.000000e+00 : f32
    %15 = vector.broadcast %cst_7 : f32 to vector<16x128xf32>
    %16 = arith.subf %15, %9 : vector<16x128xf32>
    %17 = math.log %16 : vector<16x128xf32>
    %cst_8 = arith.constant -1.000000e+02 : f32
    %18 = vector.broadcast %cst_8 : f32 to vector<16x128xf32>
    %19 = arith.maximumf %17, %18 : vector<16x128xf32>
    %20 = arith.subf %14, %19 : vector<16x128xf32>
    %21 = arith.mulf %11, %20 : vector<16x128xf32>
    %22 = arith.addf %19, %21 : vector<16x128xf32>
    %cst_9 = arith.constant 0.000000e+00 : f32
    %23 = vector.broadcast %cst_9 : f32 to vector<16x128xf32>
    %24 = arith.subf %23, %22 : vector<16x128xf32>
    %25 = vector.shape_cast %24 : vector<16x128xf32> to vector<2x8x128xf32>
    %cst_10 = arith.constant dense<0.000000e+00> : vector<8x128xf32>
    %26 = vector.multi_reduction <add>, %25, %cst_10 [0] : vector<2x8x128xf32> to vector<8x128xf32>
    %27 = arith.addf %5, %26 : vector<8x128xf32>
    %c1_i32 = arith.constant 1 : i32
    %28 = arith.addf %4, %27 : vector<8x128xf32>
    %c0_11 = arith.constant 0 : index
    %c0_12 = arith.constant 0 : index
    %c0_13 = arith.constant 0 : index
    %29 = vector.load %arg4[%c0_11, %c0_12, %c0_13] : memref<1x8x128xf32, #tpu.memory_space<vmem>>, vector<1x8x128xf32>
    %30 = vector.shape_cast %29 : vector<1x8x128xf32> to vector<8x128xf32>
    %31 = vector.shape_cast %28 : vector<8x128xf32> to vector<1x8x128xf32>
    tpu.vector_store %arg4[%c0_11, %c0_12, %c0_13], %31 {strides = array<i32>} : memref<1x8x128xf32, #tpu.memory_space<vmem>>, vector<1x8x128xf32>,
    return
  }
  func.func @transform_0(%arg0: i32, %arg1: i32) -> (i32, i32) {
    %c1_i32 = arith.constant 1 : i32
    %0 = arith.muli %arg0, %c1_i32 : i32
    %1 = arith.addi %0, %arg1 : i32
    %c0_i32 = arith.constant 0 : i32
    %2 = arith.minsi %1, %c0_i32 : i32
    %c0_i32_0 = arith.constant 0 : i32
    %c0_i32_1 = arith.constant 0 : i32
    return %2, %c0_i32_0 : i32, i32
  }
  func.func @transform_1(%arg0: i32, %arg1: i32) -> (i32, i32) {
    %c1_i32 = arith.constant 1 : i32
    %0 = arith.muli %arg0, %c1_i32 : i32
    %1 = arith.addi %0, %arg1 : i32
    %c0_i32 = arith.constant 0 : i32
    %2 = arith.minsi %1, %c0_i32 : i32
    %c0_i32_0 = arith.constant 0 : i32
    %c0_i32_1 = arith.constant 0 : i32
    return %2, %c0_i32_0 : i32, i32
  }
  func.func @transform_2(%arg0: i32, %arg1: i32) -> (i32, i32, i32) {
    %c0_i32 = arith.constant 0 : i32
    %c0_i32_0 = arith.constant 0 : i32
    %c0_i32_1 = arith.constant 0 : i32
    return %arg0, %c0_i32, %c0_i32_0 : i32, i32, i32
  }
}

</mosaic_0001>

<llo_original>
// kernel: gan_loss.1
$region0: #{gan_loss.1}
  #allocation0 [shape = 'u32[]', space=smem, size = 0x4, offset = 0x4, fixed_abs, tag = 'smem constant byte address 0x4 - core index']
  #allocation1 [shape = 'u32[144,128]{1,0:T(1,128)}', space=vmem, size = 0x12000, scoped, tag = 'internal scratch']
  %s0 = inlined_call_operand.vmem [shape: f32[16,128], index: 0, kind: input, shape index: {}]
  %s1 = inlined_call_operand.vmem [shape: f32[16,128], index: 1, kind: input, shape index: {}]
  %s2 = inlined_call_operand.vmem [shape: f32[1,8,128], index: 2, kind: output, shape index: {}]
  %s3 = sld [smem:[#allocation0]]
  $region22: #{gan_loss.1} parent=0
    _
  %s5 = ssub.s32 1, %s3
  %s6 = scalar_select 0, %s5, %s3
  // Predicated region
  $region2: #{gan_loss.1} parent=0 // pred_check
    _
  $region3: #{gan_loss.1} parent=0 // pred_check_branch
    %8 = sbr.rel (0) target = $region5
  $region4: #{gan_loss.1} parent=0 // pred_region
    %s9 = sadd.s32 0, 0
    %p10 = scmp.lt.s32.totalorder %s9, 0
    %s11 = scalar_select %p10, %s9, 0
    %s12 = smul.u32 2, %s11
    %p13 = scmp.lt.s32.totalorder %s12, 1
    %s14 = scalar_select %p13, %s12, 1
    %s15 = smul.addr %s14, 8
    %s16 = scalar_lea.vmem %s0, %s15
    %s17 = sadd.s32 0, 0
    %p18 = scmp.lt.s32.totalorder %s17, 0
    %s19 = scalar_select %p18, %s17, 0
    %s20 = smul.u32 2, %s19
  $region5: #{gan_loss.1} parent=0 // pred_fallthru
    _
  // Predicated region
  $region6: #{gan_loss.1} parent=0 // pred_check
    _
  $region7: #{gan_loss.1} parent=0 // pred_check_branch
    %22 = sbr.rel (0) target = $region9
  $region8: #{gan_loss.1} parent=0 // pred_region
    %s23 = sadd.s32 0, 0
    %p24 = scmp.lt.s32.totalorder %s23, 0
    %s25 = scalar_select %p24, %s23, 0
    %s26 = smul.u32 2, %s25
    %p27 = scmp.lt.s32.totalorder %s26, 1
    %s28 = scalar_select %p27, %s26, 1
    %s29 = smul.addr %s28, 8
    %s30 = scalar_lea.vmem %s1, %s29
    %s31 = sadd.s32 0, 0
    %p32 = scmp.lt.s32.totalorder %s31, 0
    %s33 = scalar_select %p32, %s31, 0
    %s34 = smul.u32 2, %s33
  $region9: #{gan_loss.1} parent=0 // pred_fallthru
    _
  %s35 = sadd.s32 0, 0
  %p36 = scmp.lt.s32.totalorder %s35, 0
  %s37 = scalar_select %p36, %s35, 0
  %s38 = smul.u32 2, %s37
  %p39 = scmp.lt.s32.totalorder %s38, 1
  %s40 = scalar_select %p39, %s38, 1
  %s41 = smul.addr %s40, 8
  %s42 = scalar_lea.vmem %s0, %s41
  %s43 = sadd.s32 0, 0
  %p44 = scmp.lt.s32.totalorder %s43, 0
  %s45 = scalar_select %p44, %s43, 0
  %s46 = smul.u32 2, %s45
  %p47 = scmp.lt.s32.totalorder %s46, 1
  %s48 = scalar_select %p47, %s46, 1
  %s49 = smul.addr %s48, 8
  %s50 = scalar_lea.vmem %s1, %s49
  %s51 = sadd.s32 0, 0
  %p52 = scmp.lt.s32.totalorder %s51, 0
  %s53 = scalar_select %p52, %s51, 0
  %s54 = smul.u32 2, %s53
  %p55 = scmp.lt.s32.totalorder %s54, 1
  %s56 = scalar_select %p55, %s54, 1
  %s57 = smul.addr %s56, 8
  %s58 = scalar_lea.vmem %s0, %s57
  %s59 = sadd.s32 0, 0
  %p60 = scmp.lt.s32.totalorder %s59, 0
  %s61 = scalar_select %p60, %s59, 0
  %s62 = smul.u32 2, %s61
  %s63 = sadd.s32 0, 0
  %p64 = scmp.lt.s32.totalorder %s63, 0
  %s65 = scalar_select %p64, %s63, 0
  %s66 = smul.u32 2, %s65
  %p67 = scmp.lt.s32.totalorder %s66, 1
  %s68 = scalar_select %p67, %s66, 1
  %s69 = smul.addr %s68, 8
  %s70 = scalar_lea.vmem %s1, %s69
  %s71 = sadd.s32 0, 0
  %p72 = scmp.lt.s32.totalorder %s71, 0
  %s73 = scalar_select %p72, %s71, 0
  %s74 = smul.u32 2, %s73
  %p75 = scmp.eq.s32.totalorder 0, 0
  // Predicated region
  $region10: #{gan_loss.1} parent=0 // pred_check
    %p76 = pneg %p75
  $region11: #{gan_loss.1} parent=0 // pred_check_branch
    %78 = sbr.rel (%p76) target = $region13
  $region12: #{gan_loss.1} parent=0 // pred_region
    %79 = vst [vmem:[%s2] sm:$0xff] 0.0
  $region13: #{gan_loss.1} parent=0 // pred_fallthru
    _
  %v80 = vld [vmem:[%s2] sm:$0xff]
  %v81 = vld [vmem:[%s58] sm:$0xff]
  %v82 = vld [vmem:[%s58 + $0x8] sm:$0xff]
  %v83 = vld [vmem:[%s70] sm:$0xff]
  %v84 = vld [vmem:[%s70 + $0x8] sm:$0xff]
  %v85 = vlog2.pop %v81
  %v86 = vmul.f32 %v85, 0.6931472
  %v87 = vlog2.pop %v82
  %v88 = vmul.f32 %v87, 0.6931472
  %v89 = vmax.f32 %v86, -100.0
  %v90 = vmax.f32 %v88, -100.0
  %v91 = vsub.f32 1.0, %v81
  %v92 = vsub.f32 1.0, %v82
  %v93 = vlog2.pop %v91
  %v94 = vmul.f32 %v93, 0.6931472
  %v95 = vlog2.pop %v92
  %v96 = vmul.f32 %v95, 0.6931472
  %v97 = vmax.f32 %v94, -100.0
  %v98 = vmax.f32 %v96, -100.0
  %v99 = vsub.f32 %v89, %v97
  %v100 = vsub.f32 %v90, %v98
  %v101 = vmul.f32 %v83, %v99
  %v102 = vmul.f32 %v84, %v100
  %v103 = vadd.f32 %v97, %v101
  %v104 = vadd.f32 %v98, %v102
  %v105 = vsub.f32 0.0, %v103
  %v106 = vsub.f32 0.0, %v104
  %v107 = vadd.f32 %v105, %v106
  %v108 = vadd.f32 %v107, 0.0
  %v109 = vadd.f32 %v80, %v108
  %110 = vst [vmem:[%s2] sm:$0xff] %v109
  // Predicated region
  $region14: #{gan_loss.1} parent=0 // pred_check
    _
  $region15: #{gan_loss.1} parent=0 // pred_check_branch
    %112 = sbr.rel (0) target = $region17
  $region16: #{gan_loss.1} parent=0 // pred_region
    _
  $region17: #{gan_loss.1} parent=0 // pred_fallthru
    _
  // Predicated region
  $region18: #{gan_loss.1} parent=0 // pred_check
    _
  $region19: #{gan_loss.1} parent=0 // pred_check_branch
    %114 = sbr.rel (0) target = $region21
  $region20: #{gan_loss.1} parent=0 // pred_region
    _
  $region21: #{gan_loss.1} parent=0 // pred_fallthru
    _

</llo_original>
